<compile_context>
chip_gen: v6e
topology: v6e:2x2x1
jax: 0.10.0
libtpu: 0.0.40
codegen_flags: <defaults>
</compile_context>

<pallas_src>
import jax
import jax.numpy as jnp
from jax.experimental import pallas as pl
from jax.experimental.pallas import tpu as pltpu

IN_DIM = 28 * 28
NUM_CLASSES = 10
LAYER_DIMS = [(IN_DIM, 200), (200, 100), (100, 60), (60, 30), (30, 10)]
NEG_BIG = -1e30   # finite "minus infinity" baked into padded logit lanes


def _round_up(v, m):
    return (v + m - 1) // m * m


# -----------------------------------------------------------------------------
# Kernel
# -----------------------------------------------------------------------------
def mlp_kernel(x_ref,
               w1_ref, b1_ref,
               w2_ref, b2_ref,
               w3_ref, b3_ref,
               w4_ref, b4_ref,
               w5_ref, b5_ref,
               o_ref):
    def layer(h_bf16, w_ref, b_ref, relu):
        # bf16 x bf16 on the MXU, f32 accumulation; bias/ReLU in f32 (VPU).
        z = jnp.dot(h_bf16, w_ref[...], preferred_element_type=jnp.float32)
        z = z + b_ref[...]
        if relu:
            z = jnp.maximum(z, 0.0)
        return z

    x = x_ref[...].astype(jnp.bfloat16)                             # (TB, 784)
    h = layer(x, w1_ref, b1_ref, True)                              # (TB, 256) f32
    h = layer(h.astype(jnp.bfloat16), w2_ref, b2_ref, True)         # (TB, 128)
    h = layer(h.astype(jnp.bfloat16), w3_ref, b3_ref, True)         # (TB, 128)
    h = layer(h.astype(jnp.bfloat16), w4_ref, b4_ref, True)         # (TB, 128)
    logits = layer(h.astype(jnp.bfloat16), w5_ref, b5_ref, False)   # (TB, 128) f32

    # Padded lanes already hold ~-1e30 (from padded b5), so exp underflows to
    # 0 and the softmax only "sees" the 10 real classes.  No masking needed.
    m = jnp.max(logits, axis=-1, keepdims=True)
    e = jnp.exp(logits - m)
    denom = jnp.sum(e, axis=-1, keepdims=True)
    o_ref[...] = (e * pl.reciprocal(denom, approx=True)).astype(o_ref.dtype)


# -----------------------------------------------------------------------------
# Parameter padding
# -----------------------------------------------------------------------------
def _pad_params(params):
    """Pad params to lane-friendly shapes.

    * Layer 1 keeps K = 784 (unpadded, matches the unpadded x tile).
    * Hidden Ks / all Ns are padded to multiples of 128 with zeros.
    * The LAST layer's padded bias lanes are set to NEG_BIG so padded logits
      underflow to 0 in the softmax (its padded W columns stay zero).
    * Weights -> bf16 (MXU operands), biases stay f32.
    """
    padded = []
    n_layers = len(params)
    for idx, (w, b) in enumerate(params):
        k, n = w.shape
        kp = k if idx == 0 else _round_up(k, 128)
        np_ = _round_up(n, 128)
        wp = jnp.zeros((kp, np_), jnp.bfloat16).at[:k, :n].set(w.astype(jnp.bfloat16))
        bias_fill = NEG_BIG if idx == n_layers - 1 else 0.0
        bp = jnp.full((1, np_), bias_fill, jnp.float32).at[:, :n].set(b.astype(jnp.float32))
        padded.append((wp, bp))
    return padded


def _pick_tile(bp, cap):
    """Largest multiple of 8 that divides bp and is <= cap (bp % 8 == 0)."""
    cap = max(8, min(cap, bp))
    cap = (cap // 8) * 8
    for tb in range(cap, 7, -8):
        if bp % tb == 0:
            return tb
    return 8


# -----------------------------------------------------------------------------
# Wrapper
# -----------------------------------------------------------------------------
def linear_net_forward(x, params, *, max_tb=1024):
    """x: (B, 784) float32; params: list of (W[in,out], b[1,out]) per layer."""
    B, F = x.shape
    assert F == IN_DIM

    padded = _pad_params(params)
    Np = padded[-1][0].shape[1]                  # 128 (padded class dim)

    # Bound batch padding: only to a multiple of 8 (no tile-sized over-pad).
    Bp = _round_up(B, 8)
    if Bp != B:
        x_p = jnp.zeros((Bp, F), x.dtype).at[:B].set(x)
    else:
        x_p = x                                   # no wrapper-side copy

    # Tile: largest multiple of 8 dividing Bp, capped so the grid has >= 2
    # steps whenever Bp > 8 (lets "parallel" shard across v7x's 2 TCs).
    two_core_cap = _round_up(max(Bp // 2, 8), 8) if Bp > 8 else Bp
    tb = _pick_tile(Bp, min(max_tb, two_core_cap))
    grid = (Bp // tb,)

    flat_params = []
    for wp, bp in padded:
        flat_params.append(wp)
        flat_params.append(bp)

    const_map = lambda i: (0, 0)                 # weights/biases stay resident
    in_specs = [pl.BlockSpec((tb, F), lambda i: (i, 0))]
    for wp, bp in padded:
        in_specs.append(pl.BlockSpec(wp.shape, const_map))
        in_specs.append(pl.BlockSpec(bp.shape, const_map))
    out_specs = pl.BlockSpec((tb, Np), lambda i: (i, 0))

    flops = 2 * Bp * sum(w.shape[0] * w.shape[1] for w, _ in padded)
    bytes_accessed = (x_p.size * 4
                      + sum(w.size * 2 + b.size * 4 for w, b in padded)
                      + Bp * Np * 4)
    cost = pl.CostEstimate(flops=flops,
                           transcendentals=Bp * Np,
                           bytes_accessed=bytes_accessed)

    out_padded = pl.pallas_call(
        mlp_kernel,
        out_shape=jax.ShapeDtypeStruct((Bp, Np), jnp.float32),
        grid=grid,
        in_specs=in_specs,
        out_specs=out_specs,
        compiler_params=pltpu.CompilerParams(
            dimension_semantics=("parallel",),
            vmem_limit_bytes=32 * 1024 * 1024,
        ),
        cost_estimate=cost,
    )(x_p, *flat_params)

    return out_padded[:B, :NUM_CLASSES]


# -----------------------------------------------------------------------------
# Init + reference
# -----------------------------------------------------------------------------
def init_params(key):
    """Deterministic init mimicking nn.Linear's uniform(-1/sqrt(fan_in), ...)."""
    params = []
    for fan_in, fan_out in LAYER_DIMS:
        key, kw, kb = jax.random.split(key, 3)
        bound = 1.0 / jnp.sqrt(fan_in)
        w = jax.random.uniform(kw, (fan_in, fan_out), jnp.float32, -bound, bound)
        b = jax.random.uniform(kb, (1, fan_out), jnp.float32, -bound, bound)
        params.append((w, b))
    return params


def reference_forward(x, params):
    """Matches the kernel's numerics: bf16 matmul operands, f32 accumulation."""
    h = x
    for i, (w, b) in enumerate(params):
        h = jnp.dot(h.astype(jnp.bfloat16), w.astype(jnp.bfloat16),
                    preferred_element_type=jnp.float32) + b
        if i < len(params) - 1:
            h = jnp.maximum(h, 0.0)
    return jax.nn.softmax(h, axis=-1)


if __name__ == "__main__":
    key = jax.random.PRNGKey(0)
    key, kx = jax.random.split(key)

    batch = 8
    x = jax.random.normal(kx, (batch, IN_DIM), dtype=jnp.float32)
    params = init_params(key)

    out = linear_net_forward(x, params)
    out = jax.block_until_ready(out)

    ref = reference_forward(x, params)
    assert out.shape == (batch, NUM_CLASSES)
    assert jnp.allclose(out, ref, atol=2e-3, rtol=2e-3), "mismatch vs reference"
    assert jnp.allclose(jnp.sum(out, axis=-1), 1.0, atol=5e-3), \
        "softmax rows must sum to ~1"

    print("KERNEL_OK")
</pallas_src>

<mosaic_0001>
module attributes {stable_mosaic.version = 11 : i64} {
  func.func @mlp_kernel(%arg0: i32, %arg1: memref<8x784xf32, #tpu.memory_space<vmem>>, %arg2: memref<784x256xbf16, #tpu.memory_space<vmem>>, %arg3: memref<1x256xf32, #tpu.memory_space<vmem>>, %arg4: memref<256x128xbf16, #tpu.memory_space<vmem>>, %arg5: memref<1x128xf32, #tpu.memory_space<vmem>>, %arg6: memref<128x128xbf16, #tpu.memory_space<vmem>>, %arg7: memref<1x128xf32, #tpu.memory_space<vmem>>, %arg8: memref<128x128xbf16, #tpu.memory_space<vmem>>, %arg9: memref<1x128xf32, #tpu.memory_space<vmem>>, %arg10: memref<128x128xbf16, #tpu.memory_space<vmem>>, %arg11: memref<1x128xf32, #tpu.memory_space<vmem>>, %arg12: memref<8x128xf32, #tpu.memory_space<vmem>>) attributes {dimension_semantics = [#tpu.dimension_semantics<parallel>], iteration_bounds = array<i64: 1>, scalar_prefetch = 0 : i64, scratch_operands = 0 : i64, tpu.core_type = #tpu.core_type<tc>, window_params = [{transform_indices = @transform_0, window_bounds = array<i64: 8, 784>}, {pipeline_mode = #tpu.pipeline_mode<synchronous>, transform_indices = @transform_1, window_bounds = array<i64: 784, 256>}, {pipeline_mode = #tpu.pipeline_mode<synchronous>, transform_indices = @transform_2, window_bounds = array<i64: 1, 256>}, {pipeline_mode = #tpu.pipeline_mode<synchronous>, transform_indices = @transform_3, window_bounds = array<i64: 256, 128>}, {pipeline_mode = #tpu.pipeline_mode<synchronous>, transform_indices = @transform_4, window_bounds = array<i64: 1, 128>}, {pipeline_mode = #tpu.pipeline_mode<synchronous>, transform_indices = @transform_5, window_bounds = array<i64: 128, 128>}, {pipeline_mode = #tpu.pipeline_mode<synchronous>, transform_indices = @transform_6, window_bounds = array<i64: 1, 128>}, {pipeline_mode = #tpu.pipeline_mode<synchronous>, transform_indices = @transform_7, window_bounds = array<i64: 128, 128>}, {pipeline_mode = #tpu.pipeline_mode<synchronous>, transform_indices = @transform_8, window_bounds = array<i64: 1, 128>}, {pipeline_mode = #tpu.pipeline_mode<synchronous>, transform_indices = @transform_9, window_bounds = array<i64: 128, 128>}, {pipeline_mode = #tpu.pipeline_mode<synchronous>, transform_indices = @transform_10, window_bounds = array<i64: 1, 128>}, {transform_indices = @transform_11, window_bounds = array<i64: 8, 128>}]} {
    %c0 = arith.constant 0 : index
    %c0_0 = arith.constant 0 : index
    %0 = vector.load %arg1[%c0, %c0_0] : memref<8x784xf32, #tpu.memory_space<vmem>>, vector<8x784xf32>
    %1 = arith.truncf %0 : vector<8x784xf32> to vector<8x784xbf16>
    %c0_1 = arith.constant 0 : index
    %c0_2 = arith.constant 0 : index
    %2 = vector.load %arg2[%c0_1, %c0_2] : memref<784x256xbf16, #tpu.memory_space<vmem>>, vector<784x256xbf16>
    %cst = arith.constant dense<0.000000e+00> : vector<8x256xf32>
    %3 = tpu.matmul %1, %2, %cst {dimension_numbers = #tpu.dot_dimension_numbers<[1], [0], [0], [1], [0, 0, 1, 1], [], []>} : vector<8x784xbf16>, vector<784x256xbf16>, vector<8x256xf32> -> vector<8x256xf32>
    %c0_3 = arith.constant 0 : index
    %c0_4 = arith.constant 0 : index
    %4 = vector.load %arg3[%c0_3, %c0_4] : memref<1x256xf32, #tpu.memory_space<vmem>>, vector<1x256xf32>
    %5 = vector.broadcast %4 : vector<1x256xf32> to vector<8x256xf32>
    %6 = arith.addf %3, %5 : vector<8x256xf32>
    %cst_5 = arith.constant 0.000000e+00 : f32
    %7 = vector.broadcast %cst_5 : f32 to vector<8x256xf32>
    %8 = arith.maximumf %6, %7 : vector<8x256xf32>
    %9 = arith.truncf %8 : vector<8x256xf32> to vector<8x256xbf16>
    %c0_6 = arith.constant 0 : index
    %c0_7 = arith.constant 0 : index
    %10 = vector.load %arg4[%c0_6, %c0_7] : memref<256x128xbf16, #tpu.memory_space<vmem>>, vector<256x128xbf16>
    %cst_8 = arith.constant dense<0.000000e+00> : vector<8x128xf32>
    %11 = tpu.matmul %9, %10, %cst_8 {dimension_numbers = #tpu.dot_dimension_numbers<[1], [0], [0], [1], [0, 0, 1, 1], [], []>} : vector<8x256xbf16>, vector<256x128xbf16>, vector<8x128xf32> -> vector<8x128xf32>
    %c0_9 = arith.constant 0 : index
    %c0_10 = arith.constant 0 : index
    %12 = vector.load %arg5[%c0_9, %c0_10] : memref<1x128xf32, #tpu.memory_space<vmem>>, vector<1x128xf32>
    %13 = vector.broadcast %12 : vector<1x128xf32> to vector<8x128xf32>
    %14 = arith.addf %11, %13 : vector<8x128xf32>
    %cst_11 = arith.constant 0.000000e+00 : f32
    %15 = vector.broadcast %cst_11 : f32 to vector<8x128xf32>
    %16 = arith.maximumf %14, %15 : vector<8x128xf32>
    %17 = arith.truncf %16 : vector<8x128xf32> to vector<8x128xbf16>
    %c0_12 = arith.constant 0 : index
    %c0_13 = arith.constant 0 : index
    %18 = vector.load %arg6[%c0_12, %c0_13] : memref<128x128xbf16, #tpu.memory_space<vmem>>, vector<128x128xbf16>
    %cst_14 = arith.constant dense<0.000000e+00> : vector<8x128xf32>
    %19 = tpu.matmul %17, %18, %cst_14 {dimension_numbers = #tpu.dot_dimension_numbers<[1], [0], [0], [1], [0, 0, 1, 1], [], []>} : vector<8x128xbf16>, vector<128x128xbf16>, vector<8x128xf32> -> vector<8x128xf32>
    %c0_15 = arith.constant 0 : index
    %c0_16 = arith.constant 0 : index
    %20 = vector.load %arg7[%c0_15, %c0_16] : memref<1x128xf32, #tpu.memory_space<vmem>>, vector<1x128xf32>
    %21 = vector.broadcast %20 : vector<1x128xf32> to vector<8x128xf32>
    %22 = arith.addf %19, %21 : vector<8x128xf32>
    %cst_17 = arith.constant 0.000000e+00 : f32
    %23 = vector.broadcast %cst_17 : f32 to vector<8x128xf32>
    %24 = arith.maximumf %22, %23 : vector<8x128xf32>
    %25 = arith.truncf %24 : vector<8x128xf32> to vector<8x128xbf16>
    %c0_18 = arith.constant 0 : index
    %c0_19 = arith.constant 0 : index
    %26 = vector.load %arg8[%c0_18, %c0_19] : memref<128x128xbf16, #tpu.memory_space<vmem>>, vector<128x128xbf16>
    %cst_20 = arith.constant dense<0.000000e+00> : vector<8x128xf32>
    %27 = tpu.matmul %25, %26, %cst_20 {dimension_numbers = #tpu.dot_dimension_numbers<[1], [0], [0], [1], [0, 0, 1, 1], [], []>} : vector<8x128xbf16>, vector<128x128xbf16>, vector<8x128xf32> -> vector<8x128xf32>
    %c0_21 = arith.constant 0 : index
    %c0_22 = arith.constant 0 : index
    %28 = vector.load %arg9[%c0_21, %c0_22] : memref<1x128xf32, #tpu.memory_space<vmem>>, vector<1x128xf32>
    %29 = vector.broadcast %28 : vector<1x128xf32> to vector<8x128xf32>
    %30 = arith.addf %27, %29 : vector<8x128xf32>
    %cst_23 = arith.constant 0.000000e+00 : f32
    %31 = vector.broadcast %cst_23 : f32 to vector<8x128xf32>
    %32 = arith.maximumf %30, %31 : vector<8x128xf32>
    %33 = arith.truncf %32 : vector<8x128xf32> to vector<8x128xbf16>
    %c0_24 = arith.constant 0 : index
    %c0_25 = arith.constant 0 : index
    %34 = vector.load %arg10[%c0_24, %c0_25] : memref<128x128xbf16, #tpu.memory_space<vmem>>, vector<128x128xbf16>
    %cst_26 = arith.constant dense<0.000000e+00> : vector<8x128xf32>
    %35 = tpu.matmul %33, %34, %cst_26 {dimension_numbers = #tpu.dot_dimension_numbers<[1], [0], [0], [1], [0, 0, 1, 1], [], []>} : vector<8x128xbf16>, vector<128x128xbf16>, vector<8x128xf32> -> vector<8x128xf32>
    %c0_27 = arith.constant 0 : index
    %c0_28 = arith.constant 0 : index
    %36 = vector.load %arg11[%c0_27, %c0_28] : memref<1x128xf32, #tpu.memory_space<vmem>>, vector<1x128xf32>
    %37 = vector.broadcast %36 : vector<1x128xf32> to vector<8x128xf32>
    %38 = arith.addf %35, %37 : vector<8x128xf32>
    %cst_29 = arith.constant dense<0xFF800000> : vector<8xf32>
    %39 = vector.multi_reduction <maximumf>, %38, %cst_29 [1] : vector<8x128xf32> to vector<8xf32>
    %40 = vector.shape_cast %39 : vector<8xf32> to vector<8x1xf32>
    %41 = vector.broadcast %40 : vector<8x1xf32> to vector<8x128xf32>
    %42 = arith.subf %38, %41 : vector<8x128xf32>
    %43 = math.exp %42 : vector<8x128xf32>
    %cst_30 = arith.constant dense<0.000000e+00> : vector<8xf32>
    %44 = vector.multi_reduction <add>, %43, %cst_30 [1] : vector<8x128xf32> to vector<8xf32>
    %45 = vector.shape_cast %44 : vector<8xf32> to vector<8x1xf32>
    %46 = tpu.reciprocal %45 {approx = true} : vector<8x1xf32> -> vector<8x1xf32>
    %47 = vector.broadcast %46 : vector<8x1xf32> to vector<8x128xf32>
    %48 = arith.mulf %43, %47 : vector<8x128xf32>
    %c0_31 = arith.constant 0 : index
    %c0_32 = arith.constant 0 : index
    %49 = vector.load %arg12[%c0_31, %c0_32] : memref<8x128xf32, #tpu.memory_space<vmem>>, vector<8x128xf32>
    tpu.vector_store %arg12[%c0_31, %c0_32], %48 {strides = array<i32>} : memref<8x128xf32, #tpu.memory_space<vmem>>, vector<8x128xf32>,
    return
  }
  func.func @transform_0(%arg0: i32) -> (i32, i32) {
    %c0_i32 = arith.constant 0 : i32
    %c0_i32_0 = arith.constant 0 : i32
    return %arg0, %c0_i32 : i32, i32
  }
  func.func @transform_1(%arg0: i32) -> (i32, i32) {
    %c0_i32 = arith.constant 0 : i32
    %c0_i32_0 = arith.constant 0 : i32
    %c0_i32_1 = arith.constant 0 : i32
    return %c0_i32, %c0_i32_0 : i32, i32
  }
  func.func @transform_2(%arg0: i32) -> (i32, i32) {
    %c0_i32 = arith.constant 0 : i32
    %c0_i32_0 = arith.constant 0 : i32
    %c0_i32_1 = arith.constant 0 : i32
    return %c0_i32, %c0_i32_0 : i32, i32
  }
  func.func @transform_3(%arg0: i32) -> (i32, i32) {
    %c0_i32 = arith.constant 0 : i32
    %c0_i32_0 = arith.constant 0 : i32
    %c0_i32_1 = arith.constant 0 : i32
    return %c0_i32, %c0_i32_0 : i32, i32
  }
  func.func @transform_4(%arg0: i32) -> (i32, i32) {
    %c0_i32 = arith.constant 0 : i32
    %c0_i32_0 = arith.constant 0 : i32
    %c0_i32_1 = arith.constant 0 : i32
    return %c0_i32, %c0_i32_0 : i32, i32
  }
  func.func @transform_5(%arg0: i32) -> (i32, i32) {
    %c0_i32 = arith.constant 0 : i32
    %c0_i32_0 = arith.constant 0 : i32
    %c0_i32_1 = arith.constant 0 : i32
    return %c0_i32, %c0_i32_0 : i32, i32
  }
  func.func @transform_6(%arg0: i32) -> (i32, i32) {
    %c0_i32 = arith.constant 0 : i32
    %c0_i32_0 = arith.constant 0 : i32
    %c0_i32_1 = arith.constant 0 : i32
    return %c0_i32, %c0_i32_0 : i32, i32
  }
  func.func @transform_7(%arg0: i32) -> (i32, i32) {
    %c0_i32 = arith.constant 0 : i32
    %c0_i32_0 = arith.constant 0 : i32
    %c0_i32_1 = arith.constant 0 : i32
    return %c0_i32, %c0_i32_0 : i32, i32
  }
  func.func @transform_8(%arg0: i32) -> (i32, i32) {
    %c0_i32 = arith.constant 0 : i32
    %c0_i32_0 = arith.constant 0 : i32
    %c0_i32_1 = arith.constant 0 : i32
    return %c0_i32, %c0_i32_0 : i32, i32
  }
  func.func @transform_9(%arg0: i32) -> (i32, i32) {
    %c0_i32 = arith.constant 0 : i32
    %c0_i32_0 = arith.constant 0 : i32
    %c0_i32_1 = arith.constant 0 : i32
    return %c0_i32, %c0_i32_0 : i32, i32
  }
  func.func @transform_10(%arg0: i32) -> (i32, i32) {
    %c0_i32 = arith.constant 0 : i32
    %c0_i32_0 = arith.constant 0 : i32
    %c0_i32_1 = arith.constant 0 : i32
    return %c0_i32, %c0_i32_0 : i32, i32
  }
  func.func @transform_11(%arg0: i32) -> (i32, i32) {
    %c0_i32 = arith.constant 0 : i32
    %c0_i32_0 = arith.constant 0 : i32
    return %arg0, %c0_i32 : i32, i32
  }
}

</mosaic_0001>

<llo_original>
// kernel: tpu_custom_call.1
$region0: #{tpu_custom_call.1}
  #allocation0 [shape = 'u32[]', space=smem, size = 0x4, offset = 0x4, fixed_abs, tag = 'smem constant byte address 0x4 - core index']
  #allocation1 [shape = 'u32[144,128]{1,0:T(1,128)}', space=vmem, size = 0x12000, scoped, tag = 'internal scratch']
  %s0 = inlined_call_operand.hbm [shape: f32[8,784], index: 0, kind: input, shape index: {}]
  %s1 = inlined_call_operand.hbm [shape: bf16[784,256], index: 1, kind: input, shape index: {}]
  %s2 = inlined_call_operand.vmem [shape: f32[1,256], index: 2, kind: input, shape index: {}]
  %s3 = inlined_call_operand.hbm [shape: bf16[256,128], index: 3, kind: input, shape index: {}]
  %s4 = inlined_call_operand.vmem [shape: f32[1,128], index: 4, kind: input, shape index: {}]
  %s5 = inlined_call_operand.hbm [shape: bf16[128,128], index: 5, kind: input, shape index: {}]
  %s6 = inlined_call_operand.vmem [shape: f32[1,128], index: 6, kind: input, shape index: {}]
  %s7 = inlined_call_operand.hbm [shape: bf16[128,128], index: 7, kind: input, shape index: {}]
  %s8 = inlined_call_operand.vmem [shape: f32[1,128], index: 8, kind: input, shape index: {}]
  %s9 = inlined_call_operand.hbm [shape: bf16[128,128], index: 9, kind: input, shape index: {}]
  %s10 = inlined_call_operand.vmem [shape: f32[1,128], index: 10, kind: input, shape index: {}]
  %s11 = inlined_call_operand.hbm [shape: f32[8,128], index: 11, kind: output, shape index: {}]
  %s12 = sld [smem:[#allocation0]]
  $region78: #{tpu_custom_call.1} parent=0
    _
  %s14 = ssub.s32 1, %s12
  %s15 = scalar_select 0, %s14, %s12
  $region1: #{tpu_custom_call.1} parent=0
    #allocation2 [shape = 'u8[28672]{0}', space=vmem, size = 0x7000, scoped, tag = 'input window, operand 0, single buffered']
    #allocation3 [shape = 's32[1]{0}', space=sflag, size = 0x4, scoped, tag = 'scoped memory for tpu_custom_call.1']
    #allocation4 [shape = 's32[1]{0}', space=sflag, size = 0x4, scoped, tag = 'scoped memory for tpu_custom_call.1']
    #allocation5 [shape = 'u8[401408]{0}', space=vmem, size = 0x62000, scoped, tag = 'input window, operand 1, single buffered']
    #allocation6 [shape = 's32[1]{0}', space=sflag, size = 0x4, scoped, tag = 'scoped memory for tpu_custom_call.1']
    #allocation7 [shape = 'u8[65536]{0}', space=vmem, size = 0x10000, scoped, tag = 'input window, operand 3, single buffered']
    #allocation8 [shape = 'u8[32768]{0}', space=vmem, size = 0x8000, scoped, tag = 'input window, operand 5, single buffered']
    #allocation9 [shape = 's32[1]{0}', space=sflag, size = 0x4, scoped, tag = 'scoped memory for tpu_custom_call.1']
    #allocation10 [shape = 'u8[32768]{0}', space=vmem, size = 0x8000, scoped, tag = 'input window, operand 7, single buffered']
    #allocation11 [shape = 'u8[32768]{0}', space=vmem, size = 0x8000, scoped, tag = 'input window, operand 9, single buffered']
    #allocation12 [shape = 's32[1]{0}', space=sflag, size = 0x4, scoped, tag = 'scoped memory for tpu_custom_call.1']
    #allocation13 [shape = 'u8[4096]{0}', space=vmem, size = 0x1000, scoped, tag = 'output window, operand 0, single buffered']
    %16 = vsyncpa [#allocation3], 0
    %17 = vsyncpa [#allocation6], 0
    %18 = vsyncpa [#allocation9], 0
    %19 = vsyncpa [#allocation12], 0
    %20 = vsyncpa [#allocation4], 0
    // Predicated region
    $region2: #{tpu_custom_call.1} parent=1 // pred_check
      _
    $region3: #{tpu_custom_call.1} parent=1 // pred_check_branch
      %22 = sbr.rel (0) target = $region5
    $region4: #{tpu_custom_call.1} parent=1 // pred_region
      %s24 = ssub.s32 896, 896
      %25 = vsyncadd [#allocation3], %s24
      %s27 = sshll.u32 [#allocation2], 4
      %s28 = int_to_ptr.vmem [resolvable:$true] %s27
      %30 = dma.hbm_to_vmem [thread:$0]  %s0, 896, %s28, [#allocation3]
    $region5: #{tpu_custom_call.1} parent=1 // pred_fallthru
      _
    // Predicated region
    $region6: #{tpu_custom_call.1} parent=1 // pred_check
      _
    $region7: #{tpu_custom_call.1} parent=1 // pred_check_branch
      %32 = sbr.rel (0) target = $region9
    $region8: #{tpu_custom_call.1} parent=1 // pred_region
      %s34 = ssub.s32 12544, 12544
      %35 = vsyncadd [#allocation6], %s34
      %s36 = sshll.u32 [#allocation5], 4
      %s37 = int_to_ptr.vmem [resolvable:$true] %s36
      %42 = dma.hbm_to_vmem [thread:$0]  %s1, 12544, %s37, [#allocation6], 128, 128, 8
    $region9: #{tpu_custom_call.1} parent=1 // pred_fallthru
      _
    // Predicated region
    $region10: #{tpu_custom_call.1} parent=1 // pred_check
      _
    $region11: #{tpu_custom_call.1} parent=1 // pred_check_branch
      %44 = sbr.rel (0) target = $region13
    $region12: #{tpu_custom_call.1} parent=1 // pred_region
      _
    $region13: #{tpu_custom_call.1} parent=1 // pred_fallthru
      _
    // Predicated region
    $region14: #{tpu_custom_call.1} parent=1 // pred_check
      _
    $region15: #{tpu_custom_call.1} parent=1 // pred_check_branch
      %46 = sbr.rel (0) target = $region17
    $region16: #{tpu_custom_call.1} parent=1 // pred_region
      %s48 = ssub.s32 2048, 2048
      %49 = vsyncadd [#allocation6], %s48
      %s50 = sshll.u32 [#allocation7], 4
      %s51 = int_to_ptr.vmem [resolvable:$true] %s50
      %56 = dma.hbm_to_vmem [thread:$0]  %s3, 2048, %s51, [#allocation6], 64, 64, 4
    $region17: #{tpu_custom_call.1} parent=1 // pred_fallthru
      _
    // Predicated region
    $region18: #{tpu_custom_call.1} parent=1 // pred_check
      _
    $region19: #{tpu_custom_call.1} parent=1 // pred_check_branch
      %58 = sbr.rel (0) target = $region21
    $region20: #{tpu_custom_call.1} parent=1 // pred_region
      _
    $region21: #{tpu_custom_call.1} parent=1 // pred_fallthru
      _
    // Predicated region
    $region22: #{tpu_custom_call.1} parent=1 // pred_check
      _
    $region23: #{tpu_custom_call.1} parent=1 // pred_check_branch
      %60 = sbr.rel (0) target = $region25
    $region24: #{tpu_custom_call.1} parent=1 // pred_region
      %s62 = ssub.s32 1024, 1024
      %63 = vsyncadd [#allocation9], %s62
      %s64 = sshll.u32 [#allocation8], 4
      %s65 = int_to_ptr.vmem [resolvable:$true] %s64
      %70 = dma.hbm_to_vmem [thread:$0]  %s5, 1024, %s65, [#allocation9], 64, 64, 4
    $region25: #{tpu_custom_call.1} parent=1 // pred_fallthru
      _
    // Predicated region
    $region26: #{tpu_custom_call.1} parent=1 // pred_check
      _
    $region27: #{tpu_custom_call.1} parent=1 // pred_check_branch
      %72 = sbr.rel (0) target = $region29
    $region28: #{tpu_custom_call.1} parent=1 // pred_region
      _
    $region29: #{tpu_custom_call.1} parent=1 // pred_fallthru
      _
    // Predicated region
    $region30: #{tpu_custom_call.1} parent=1 // pred_check
      _
    $region31: #{tpu_custom_call.1} parent=1 // pred_check_branch
      %74 = sbr.rel (0) target = $region33
    $region32: #{tpu_custom_call.1} parent=1 // pred_region
      %s76 = ssub.s32 1024, 1024
      %77 = vsyncadd [#allocation9], %s76
      %s78 = sshll.u32 [#allocation10], 4
      %s79 = int_to_ptr.vmem [resolvable:$true] %s78
      %84 = dma.hbm_to_vmem [thread:$0]  %s7, 1024, %s79, [#allocation9], 64, 64, 4
    $region33: #{tpu_custom_call.1} parent=1 // pred_fallthru
      _
    // Predicated region
    $region34: #{tpu_custom_call.1} parent=1 // pred_check
      _
    $region35: #{tpu_custom_call.1} parent=1 // pred_check_branch
      %86 = sbr.rel (0) target = $region37
    $region36: #{tpu_custom_call.1} parent=1 // pred_region
      _
    $region37: #{tpu_custom_call.1} parent=1 // pred_fallthru
      _
    // Predicated region
    $region38: #{tpu_custom_call.1} parent=1 // pred_check
      _
    $region39: #{tpu_custom_call.1} parent=1 // pred_check_branch
      %88 = sbr.rel (0) target = $region41
    $region40: #{tpu_custom_call.1} parent=1 // pred_region
      %s90 = ssub.s32 1024, 1024
      %91 = vsyncadd [#allocation12], %s90
      %s92 = sshll.u32 [#allocation11], 4
      %s93 = int_to_ptr.vmem [resolvable:$true] %s92
      %98 = dma.hbm_to_vmem [thread:$0]  %s9, 1024, %s93, [#allocation12], 64, 64, 4
    $region41: #{tpu_custom_call.1} parent=1 // pred_fallthru
      _
    // Predicated region
    $region42: #{tpu_custom_call.1} parent=1 // pred_check
      _
    $region43: #{tpu_custom_call.1} parent=1 // pred_check_branch
      %100 = sbr.rel (0) target = $region45
    $region44: #{tpu_custom_call.1} parent=1 // pred_region
      _
    $region45: #{tpu_custom_call.1} parent=1 // pred_fallthru
      _
    // Predicated region
    $region46: #{tpu_custom_call.1} parent=1 // pred_check
      _
    $region47: #{tpu_custom_call.1} parent=1 // pred_check_branch
      %102 = sbr.rel (0) target = $region49
    $region48: #{tpu_custom_call.1} parent=1 // pred_region
      %103 = dma.done [#allocation3], 896
    $region49: #{tpu_custom_call.1} parent=1 // pred_fallthru
      _
    // Predicated region
    $region50: #{tpu_custom_call.1} parent=1 // pred_check
      _
    $region51: #{tpu_custom_call.1} parent=1 // pred_check_branch
      %105 = sbr.rel (0) target = $region53
    $region52: #{tpu_custom_call.1} parent=1 // pred_region
      %106 = dma.done [#allocation6], 12544
    $region53: #{tpu_custom_call.1} parent=1 // pred_fallthru
      _
    // Predicated region
    $region54: #{tpu_custom_call.1} parent=1 // pred_check
      _
    $region55: #{tpu_custom_call.1} parent=1 // pred_check_branch
      %108 = sbr.rel (0) target = $region57
    $region56: #{tpu_custom_call.1} parent=1 // pred_region
      %109 = dma.done [#allocation6], 2048
    $region57: #{tpu_custom_call.1} parent=1 // pred_fallthru
      _
    // Predicated region
    $region58: #{tpu_custom_call.1} parent=1 // pred_check
      _
    $region59: #{tpu_custom_call.1} parent=1 // pred_check_branch
      %111 = sbr.rel (0) target = $region61
    $region60: #{tpu_custom_call.1} parent=1 // pred_region
      %112 = dma.done [#allocation9], 1024
    $region61: #{tpu_custom_call.1} parent=1 // pred_fallthru
      _
    // Predicated region
    $region62: #{tpu_custom_call.1} parent=1 // pred_check
      _
    $region63: #{tpu_custom_call.1} parent=1 // pred_check_branch
      %114 = sbr.rel (0) target = $region65
    $region64: #{tpu_custom_call.1} parent=1 // pred_region
      %115 = dma.done [#allocation9], 1024
    $region65: #{tpu_custom_call.1} parent=1 // pred_fallthru
      _
    // Predicated region
    $region66: #{tpu_custom_call.1} parent=1 // pred_check
      _
    $region67: #{tpu_custom_call.1} parent=1 // pred_check_branch
      %117 = sbr.rel (0) target = $region69
    $region68: #{tpu_custom_call.1} parent=1 // pred_region
      %118 = dma.done [#allocation12], 1024
    $region69: #{tpu_custom_call.1} parent=1 // pred_fallthru
      _
    %v120 = vld [vmem:[#allocation2] sm:$0xff]
    %v121 = vld [vmem:[#allocation2 + $0x8] sm:$0xff]
    %v122 = vld [vmem:[#allocation2 + $0x10] sm:$0xff]
    %v123 = vld [vmem:[#allocation2 + $0x18] sm:$0xff]
    %v124 = vld [vmem:[#allocation2 + $0x20] sm:$0xff]
    %v125 = vld [vmem:[#allocation2 + $0x28] sm:$0xff]
    %v126 = vld [vmem:[#allocation2 + $0x30] sm:$0xff]
    %v127 = vpack.c.bf16 %v120, %v120
    %v128 = vpack.c.bf16 %v121, %v121
    %v129 = vpack.c.bf16 %v122, %v122
    %v130 = vpack.c.bf16 %v123, %v123
    %v131 = vpack.c.bf16 %v124, %v124
    %v132 = vpack.c.bf16 %v125, %v125
    %v133 = vpack.c.bf16 %v126, %v126
    %v134 = vld [vmem:[#allocation5] sm:$0xff]
    %v135 = vld [vmem:[#allocation5 + $0x8] sm:$0xff]
    %v136 = vld [vmem:[#allocation5 + $0x10] sm:$0xff]
    %v137 = vld [vmem:[#allocation5 + $0x18] sm:$0xff]
    %v138 = vld [vmem:[#allocation5 + $0x20] sm:$0xff]
    %v139 = vld [vmem:[#allocation5 + $0x28] sm:$0xff]
    %v140 = vld [vmem:[#allocation5 + $0x30] sm:$0xff]
    %v141 = vld [vmem:[#allocation5 + $0x38] sm:$0xff]
    %v142 = vld [vmem:[#allocation5 + $0x40] sm:$0xff]
    %v143 = vld [vmem:[#allocation5 + $0x48] sm:$0xff]
    %v144 = vld [vmem:[#allocation5 + $0x50] sm:$0xff]
    %v145 = vld [vmem:[#allocation5 + $0x58] sm:$0xff]
    %v146 = vld [vmem:[#allocation5 + $0x60] sm:$0xff]
    %v147 = vld [vmem:[#allocation5 + $0x68] sm:$0xff]
    %v148 = vld [vmem:[#allocation5 + $0x70] sm:$0xff]
    %v149 = vld [vmem:[#allocation5 + $0x78] sm:$0xff]
    %v150 = vld [vmem:[#allocation5 + $0x80] sm:$0xff]
    %v151 = vld [vmem:[#allocation5 + $0x88] sm:$0xff]
    %v152 = vld [vmem:[#allocation5 + $0x90] sm:$0xff]
    %v153 = vld [vmem:[#allocation5 + $0x98] sm:$0xff]
    %v154 = vld [vmem:[#allocation5 + $0xa0] sm:$0xff]
    %v155 = vld [vmem:[#allocation5 + $0xa8] sm:$0xff]
    %v156 = vld [vmem:[#allocation5 + $0xb0] sm:$0xff]
    %v157 = vld [vmem:[#allocation5 + $0xb8] sm:$0xff]
    %v158 = vld [vmem:[#allocation5 + $0xc0] sm:$0xff]
    %v159 = vld [vmem:[#allocation5 + $0xc8] sm:$0xff]
    %v160 = vld [vmem:[#allocation5 + $0xd0] sm:$0xff]
    %v161 = vld [vmem:[#allocation5 + $0xd8] sm:$0xff]
    %v162 = vld [vmem:[#allocation5 + $0xe0] sm:$0xff]
    %v163 = vld [vmem:[#allocation5 + $0xe8] sm:$0xff]
    %v164 = vld [vmem:[#allocation5 + $0xf0] sm:$0xff]
    %v165 = vld [vmem:[#allocation5 + $0xf8] sm:$0xff]
    %v166 = vld [vmem:[#allocation5 + $0x100] sm:$0xff]
    %v167 = vld [vmem:[#allocation5 + $0x108] sm:$0xff]
    %v168 = vld [vmem:[#allocation5 + $0x110] sm:$0xff]
    %v169 = vld [vmem:[#allocation5 + $0x118] sm:$0xff]
    %v170 = vld [vmem:[#allocation5 + $0x120] sm:$0xff]
    %v171 = vld [vmem:[#allocation5 + $0x128] sm:$0xff]
    %v172 = vld [vmem:[#allocation5 + $0x130] sm:$0xff]
    %v173 = vld [vmem:[#allocation5 + $0x138] sm:$0xff]
    %v174 = vld [vmem:[#allocation5 + $0x140] sm:$0xff]
    %v175 = vld [vmem:[#allocation5 + $0x148] sm:$0xff]
    %v176 = vld [vmem:[#allocation5 + $0x150] sm:$0xff]
    %v177 = vld [vmem:[#allocation5 + $0x158] sm:$0xff]
    %v178 = vld [vmem:[#allocation5 + $0x160] sm:$0xff]
    %v179 = vld [vmem:[#allocation5 + $0x168] sm:$0xff]
    %v180 = vld [vmem:[#allocation5 + $0x170] sm:$0xff]
    %v181 = vld [vmem:[#allocation5 + $0x178] sm:$0xff]
    %v182 = vld [vmem:[#allocation5 + $0x180] sm:$0xff]
    %v183 = vld [vmem:[#allocation5 + $0x188] sm:$0xff]
    %v184 = vld [vmem:[#allocation5 + $0x190] sm:$0xff]
    %v185 = vld [vmem:[#allocation5 + $0x198] sm:$0xff]
    %v186 = vld [vmem:[#allocation5 + $0x1a0] sm:$0xff]
    %v187 = vld [vmem:[#allocation5 + $0x1a8] sm:$0xff]
    %v188 = vld [vmem:[#allocation5 + $0x1b0] sm:$0xff]
    %v189 = vld [vmem:[#allocation5 + $0x1b8] sm:$0xff]
    %v190 = vld [vmem:[#allocation5 + $0x1c0] sm:$0xff]
    %v191 = vld [vmem:[#allocation5 + $0x1c8] sm:$0xff]
    %v192 = vld [vmem:[#allocation5 + $0x1d0] sm:$0xff]
    %v193 = vld [vmem:[#allocation5 + $0x1d8] sm:$0xff]
    %v194 = vld [vmem:[#allocation5 + $0x1e0] sm:$0xff]
    %v195 = vld [vmem:[#allocation5 + $0x1e8] sm:$0xff]
    %v196 = vld [vmem:[#allocation5 + $0x1f0] sm:$0xff]
    %v197 = vld [vmem:[#allocation5 + $0x1f8] sm:$0xff]
    %v198 = vld [vmem:[#allocation5 + $0x200] sm:$0xff]
    %v199 = vld [vmem:[#allocation5 + $0x208] sm:$0xff]
    %v200 = vld [vmem:[#allocation5 + $0x210] sm:$0xff]
    %v201 = vld [vmem:[#allocation5 + $0x218] sm:$0xff]
    %v202 = vld [vmem:[#allocation5 + $0x220] sm:$0xff]
    %v203 = vld [vmem:[#allocation5 + $0x228] sm:$0xff]
    %v204 = vld [vmem:[#allocation5 + $0x230] sm:$0xff]
    %v205 = vld [vmem:[#allocation5 + $0x238] sm:$0xff]
    %v206 = vld [vmem:[#allocation5 + $0x240] sm:$0xff]
    %v207 = vld [vmem:[#allocation5 + $0x248] sm:$0xff]
    %v208 = vld [vmem:[#allocation5 + $0x250] sm:$0xff]
    %v209 = vld [vmem:[#allocation5 + $0x258] sm:$0xff]
    %v210 = vld [vmem:[#allocation5 + $0x260] sm:$0xff]
    %v211 = vld [vmem:[#allocation5 + $0x268] sm:$0xff]
    %v212 = vld [vmem:[#allocation5 + $0x270] sm:$0xff]
    %v213 = vld [vmem:[#allocation5 + $0x278] sm:$0xff]
    %v214 = vld [vmem:[#allocation5 + $0x280] sm:$0xff]
    %v215 = vld [vmem:[#allocation5 + $0x288] sm:$0xff]
    %v216 = vld [vmem:[#allocation5 + $0x290] sm:$0xff]
    %v217 = vld [vmem:[#allocation5 + $0x298] sm:$0xff]
    %v218 = vld [vmem:[#allocation5 + $0x2a0] sm:$0xff]
    %v219 = vld [vmem:[#allocation5 + $0x2a8] sm:$0xff]
    %v220 = vld [vmem:[#allocation5 + $0x2b0] sm:$0xff]
    %v221 = vld [vmem:[#allocation5 + $0x2b8] sm:$0xff]
    %v222 = vld [vmem:[#allocation5 + $0x2c0] sm:$0xff]
    %v223 = vld [vmem:[#allocation5 + $0x2c8] sm:$0xff]
    %v224 = vld [vmem:[#allocation5 + $0x2d0] sm:$0xff]
    %v225 = vld [vmem:[#allocation5 + $0x2d8] sm:$0xff]
    %v226 = vld [vmem:[#allocation5 + $0x2e0] sm:$0xff]
    %v227 = vld [vmem:[#allocation5 + $0x2e8] sm:$0xff]
    %v228 = vld [vmem:[#allocation5 + $0x2f0] sm:$0xff]
    %v229 = vld [vmem:[#allocation5 + $0x2f8] sm:$0xff]
    %v230 = vld [vmem:[#allocation5 + $0x300] sm:$0xff]
    %v231 = vld [vmem:[#allocation5 + $0x308] sm:$0xff]
    %v232 = vld [vmem:[%s2] sm:$0x3]
    %v234 = vlaneseq
    %v235 = vshrl.u32 %v234, 7
    %v236 = vsub.s32 0, %v235
    %v237 = vrot.slane %v232, %v236
    %v238 = vlaneseq
    %v239 = vshrl.u32 %v238, 7
    %v240 = vsub.s32 1, %v239
    %v241 = vrot.slane %v232, %v240
    %v342 = vunpack.c.l.b16 %v134
    %v343 = vunpack.c.h.b16 %v134
    %v344 = vunpack.c.l.b16 %v135
    %v345 = vunpack.c.h.b16 %v135
    %v346 = vunpack.c.l.b16 %v136
    %v347 = vunpack.c.h.b16 %v136
    %v348 = vunpack.c.l.b16 %v137
    %v349 = vunpack.c.h.b16 %v137
    %v350 = vunpack.c.l.b16 %v138
    %v351 = vunpack.c.h.b16 %v138
    %v352 = vunpack.c.l.b16 %v139
    %v353 = vunpack.c.h.b16 %v139
    %v354 = vunpack.c.l.b16 %v140
    %v355 = vunpack.c.h.b16 %v140
    %v356 = vunpack.c.l.b16 %v141
    %v357 = vunpack.c.h.b16 %v141
    %v358 = vunpack.c.l.b16 %v142
    %v359 = vunpack.c.h.b16 %v142
    %v360 = vunpack.c.l.b16 %v143
    %v361 = vunpack.c.h.b16 %v143
    %v362 = vunpack.c.l.b16 %v144
    %v363 = vunpack.c.h.b16 %v144
    %v364 = vunpack.c.l.b16 %v145
    %v365 = vunpack.c.h.b16 %v145
    %v366 = vunpack.c.l.b16 %v146
    %v367 = vunpack.c.h.b16 %v146
    %v368 = vunpack.c.l.b16 %v147
    %v369 = vunpack.c.h.b16 %v147
    %v370 = vunpack.c.l.b16 %v148
    %v371 = vunpack.c.h.b16 %v148
    %v372 = vunpack.c.l.b16 %v149
    %v373 = vunpack.c.h.b16 %v149
    %v374 = vunpack.c.l.b16 %v150
    %v375 = vunpack.c.h.b16 %v150
    %v376 = vunpack.c.l.b16 %v151
    %v377 = vunpack.c.h.b16 %v151
    %v378 = vunpack.c.l.b16 %v152
    %v379 = vunpack.c.h.b16 %v152
    %v380 = vunpack.c.l.b16 %v153
    %v381 = vunpack.c.h.b16 %v153
    %v382 = vunpack.c.l.b16 %v154
    %v383 = vunpack.c.h.b16 %v154
    %v384 = vunpack.c.l.b16 %v155
    %v385 = vunpack.c.h.b16 %v155
    %v386 = vunpack.c.l.b16 %v156
    %v387 = vunpack.c.h.b16 %v156
    %v388 = vunpack.c.l.b16 %v157
    %v389 = vunpack.c.h.b16 %v157
    %v390 = vunpack.c.l.b16 %v158
    %v391 = vunpack.c.h.b16 %v158
    %v392 = vunpack.c.l.b16 %v159
    %v393 = vunpack.c.h.b16 %v159
    %v394 = vunpack.c.l.b16 %v160
    %v395 = vunpack.c.h.b16 %v160
    %v396 = vunpack.c.l.b16 %v161
    %v397 = vunpack.c.h.b16 %v161
    %v398 = vunpack.c.l.b16 %v162
    %v399 = vunpack.c.h.b16 %v162
    %v400 = vunpack.c.l.b16 %v163
    %v401 = vunpack.c.h.b16 %v163
    %v402 = vunpack.c.l.b16 %v164
    %v403 = vunpack.c.h.b16 %v164
    %v404 = vunpack.c.l.b16 %v165
    %v405 = vunpack.c.h.b16 %v165
    %v406 = vunpack.c.l.b16 %v166
    %v407 = vunpack.c.h.b16 %v166
    %v408 = vunpack.c.l.b16 %v167
    %v409 = vunpack.c.h.b16 %v167
    %v410 = vunpack.c.l.b16 %v168
    %v411 = vunpack.c.h.b16 %v168
    %v412 = vunpack.c.l.b16 %v169
    %v413 = vunpack.c.h.b16 %v169
    %v414 = vunpack.c.l.b16 %v170
    %v415 = vunpack.c.h.b16 %v170
    %v416 = vunpack.c.l.b16 %v171
    %v417 = vunpack.c.h.b16 %v171
    %v418 = vunpack.c.l.b16 %v172
    %v419 = vunpack.c.h.b16 %v172
    %v420 = vunpack.c.l.b16 %v173
    %v421 = vunpack.c.h.b16 %v173
    %v422 = vunpack.c.l.b16 %v174
    %v423 = vunpack.c.h.b16 %v174
    %v424 = vunpack.c.l.b16 %v175
    %v425 = vunpack.c.h.b16 %v175
    %v426 = vunpack.c.l.b16 %v176
    %v427 = vunpack.c.h.b16 %v176
    %v428 = vunpack.c.l.b16 %v177
    %v429 = vunpack.c.h.b16 %v177
    %v430 = vunpack.c.l.b16 %v178
    %v431 = vunpack.c.h.b16 %v178
    %v432 = vunpack.c.l.b16 %v179
    %v433 = vunpack.c.h.b16 %v179
    %v434 = vunpack.c.l.b16 %v180
    %v435 = vunpack.c.h.b16 %v180
    %v436 = vunpack.c.l.b16 %v181
    %v437 = vunpack.c.h.b16 %v181
    %v438 = vunpack.c.l.b16 %v182
    %v439 = vunpack.c.h.b16 %v182
    %v440 = vunpack.c.l.b16 %v183
    %v441 = vunpack.c.h.b16 %v183
    %v442 = vunpack.c.l.b16 %v184
    %v443 = vunpack.c.h.b16 %v184
    %v444 = vunpack.c.l.b16 %v185
    %v445 = vunpack.c.h.b16 %v185
    %v446 = vunpack.c.l.b16 %v186
    %v447 = vunpack.c.h.b16 %v186
    %v448 = vunpack.c.l.b16 %v187
    %v449 = vunpack.c.h.b16 %v187
    %v450 = vunpack.c.l.b16 %v188
    %v451 = vunpack.c.h.b16 %v188
    %v452 = vunpack.c.l.b16 %v189
    %v453 = vunpack.c.h.b16 %v189
    %v454 = vunpack.c.l.b16 %v190
    %v455 = vunpack.c.h.b16 %v190
    %v456 = vunpack.c.l.b16 %v191
    %v457 = vunpack.c.h.b16 %v191
    %v458 = vunpack.c.l.b16 %v192
    %v459 = vunpack.c.h.b16 %v192
    %v460 = vunpack.c.l.b16 %v193
    %v461 = vunpack.c.h.b16 %v193
    %v462 = vunpack.c.l.b16 %v194
    %v463 = vunpack.c.h.b16 %v194
    %v464 = vunpack.c.l.b16 %v195
    %v465 = vunpack.c.h.b16 %v195
    %v466 = vunpack.c.l.b16 %v196
    %v467 = vunpack.c.h.b16 %v196
    %v468 = vunpack.c.l.b16 %v197
    %v469 = vunpack.c.h.b16 %v197
    %v470 = vunpack.c.l.b16 %v198
    %v471 = vunpack.c.h.b16 %v198
    %v472 = vunpack.c.l.b16 %v199
    %v473 = vunpack.c.h.b16 %v199
    %v474 = vunpack.c.l.b16 %v200
    %v475 = vunpack.c.h.b16 %v200
    %v476 = vunpack.c.l.b16 %v201
    %v477 = vunpack.c.h.b16 %v201
    %v478 = vunpack.c.l.b16 %v202
    %v479 = vunpack.c.h.b16 %v202
    %v480 = vunpack.c.l.b16 %v203
    %v481 = vunpack.c.h.b16 %v203
    %v482 = vunpack.c.l.b16 %v204
    %v483 = vunpack.c.h.b16 %v204
    %v484 = vunpack.c.l.b16 %v205
    %v485 = vunpack.c.h.b16 %v205
    %v486 = vunpack.c.l.b16 %v206
    %v487 = vunpack.c.h.b16 %v206
    %v488 = vunpack.c.l.b16 %v207
    %v489 = vunpack.c.h.b16 %v207
    %v490 = vunpack.c.l.b16 %v208
    %v491 = vunpack.c.h.b16 %v208
    %v492 = vunpack.c.l.b16 %v209
    %v493 = vunpack.c.h.b16 %v209
    %v494 = vunpack.c.l.b16 %v210
    %v495 = vunpack.c.h.b16 %v210
    %v496 = vunpack.c.l.b16 %v211
    %v497 = vunpack.c.h.b16 %v211
    %v498 = vunpack.c.l.b16 %v212
    %v499 = vunpack.c.h.b16 %v212
    %v500 = vunpack.c.l.b16 %v213
    %v501 = vunpack.c.h.b16 %v213
    %v502 = vunpack.c.l.b16 %v214
    %v503 = vunpack.c.h.b16 %v214
    %v504 = vunpack.c.l.b16 %v215
    %v505 = vunpack.c.h.b16 %v215
    %v506 = vunpack.c.l.b16 %v216
    %v507 = vunpack.c.h.b16 %v216
    %v508 = vunpack.c.l.b16 %v217
    %v509 = vunpack.c.h.b16 %v217
    %v510 = vunpack.c.l.b16 %v218
    %v511 = vunpack.c.h.b16 %v218
    %v512 = vunpack.c.l.b16 %v219
    %v513 = vunpack.c.h.b16 %v219
    %v514 = vunpack.c.l.b16 %v220
    %v515 = vunpack.c.h.b16 %v220
    %v516 = vunpack.c.l.b16 %v221
    %v517 = vunpack.c.h.b16 %v221
    %v518 = vunpack.c.l.b16 %v222
    %v519 = vunpack.c.h.b16 %v222
    %v520 = vunpack.c.l.b16 %v223
    %v521 = vunpack.c.h.b16 %v223
    %v522 = vunpack.c.l.b16 %v224
    %v523 = vunpack.c.h.b16 %v224
    %v524 = vunpack.c.l.b16 %v225
    %v525 = vunpack.c.h.b16 %v225
    %v526 = vunpack.c.l.b16 %v226
    %v527 = vunpack.c.h.b16 %v226
    %v528 = vunpack.c.l.b16 %v227
    %v529 = vunpack.c.h.b16 %v227
    %v530 = vunpack.c.l.b16 %v228
    %v531 = vunpack.c.h.b16 %v228
    %v532 = vunpack.c.l.b16 %v229
    %v533 = vunpack.c.h.b16 %v229
    %v534 = vunpack.c.l.b16 %v230
    %v535 = vunpack.c.h.b16 %v230
    %v536 = vunpack.c.l.b16 %v231
    %v537 = vunpack.c.h.b16 %v231
    %v538 = vpack.c.b16 %v344, %v342
    %v539 = vpack.c.b16 %v345, %v343
    %v540 = vpack.c.b16 %v348, %v346
    %v541 = vpack.c.b16 %v349, %v347
    %v542 = vpack.c.b16 %v352, %v350
    %v543 = vpack.c.b16 %v353, %v351
    %v544 = vpack.c.b16 %v356, %v354
    %v545 = vpack.c.b16 %v357, %v355
    %v546 = vpack.c.b16 %v360, %v358
    %v547 = vpack.c.b16 %v361, %v359
    %v548 = vpack.c.b16 %v364, %v362
    %v549 = vpack.c.b16 %v365, %v363
    %v550 = vpack.c.b16 %v368, %v366
    %v551 = vpack.c.b16 %v369, %v367
    %v552 = vpack.c.b16 %v372, %v370
    %v553 = vpack.c.b16 %v373, %v371
    %v554 = vpack.c.b16 %v376, %v374
    %v555 = vpack.c.b16 %v377, %v375
    %v556 = vpack.c.b16 %v380, %v378
    %v557 = vpack.c.b16 %v381, %v379
    %v558 = vpack.c.b16 %v384, %v382
    %v559 = vpack.c.b16 %v385, %v383
    %v560 = vpack.c.b16 %v388, %v386
    %v561 = vpack.c.b16 %v389, %v387
    %v562 = vpack.c.b16 %v392, %v390
    %v563 = vpack.c.b16 %v393, %v391
    %v564 = vpack.c.b16 %v396, %v394
    %v565 = vpack.c.b16 %v397, %v395
    %v566 = vpack.c.b16 %v400, %v398
    %v567 = vpack.c.b16 %v401, %v399
    %v568 = vpack.c.b16 %v404, %v402
    %v569 = vpack.c.b16 %v405, %v403
    %v570 = vpack.c.b16 %v408, %v406
    %v571 = vpack.c.b16 %v409, %v407
    %v572 = vpack.c.b16 %v412, %v410
    %v573 = vpack.c.b16 %v413, %v411
    %v574 = vpack.c.b16 %v416, %v414
    %v575 = vpack.c.b16 %v417, %v415
    %v576 = vpack.c.b16 %v420, %v418
    %v577 = vpack.c.b16 %v421, %v419
    %v578 = vpack.c.b16 %v424, %v422
    %v579 = vpack.c.b16 %v425, %v423
    %v580 = vpack.c.b16 %v428, %v426
    %v581 = vpack.c.b16 %v429, %v427
    %v582 = vpack.c.b16 %v432, %v430
    %v583 = vpack.c.b16 %v433, %v431
    %v584 = vpack.c.b16 %v436, %v434
    %v585 = vpack.c.b16 %v437, %v435
    %v586 = vpack.c.b16 %v440, %v438
    %v587 = vpack.c.b16 %v441, %v439
    %v588 = vpack.c.b16 %v444, %v442
    %v589 = vpack.c.b16 %v445, %v443
    %v590 = vpack.c.b16 %v448, %v446
    %v591 = vpack.c.b16 %v449, %v447
    %v592 = vpack.c.b16 %v452, %v450
    %v593 = vpack.c.b16 %v453, %v451
    %v594 = vpack.c.b16 %v456, %v454
    %v595 = vpack.c.b16 %v457, %v455
    %v596 = vpack.c.b16 %v460, %v458
    %v597 = vpack.c.b16 %v461, %v459
    %v598 = vpack.c.b16 %v464, %v462
    %v599 = vpack.c.b16 %v465, %v463
    %v600 = vpack.c.b16 %v468, %v466
    %v601 = vpack.c.b16 %v469, %v467
    %v602 = vpack.c.b16 %v472, %v470
    %v603 = vpack.c.b16 %v473, %v471
    %v604 = vpack.c.b16 %v476, %v474
    %v605 = vpack.c.b16 %v477, %v475
    %v606 = vpack.c.b16 %v480, %v478
    %v607 = vpack.c.b16 %v481, %v479
    %v608 = vpack.c.b16 %v484, %v482
    %v609 = vpack.c.b16 %v485, %v483
    %v610 = vpack.c.b16 %v488, %v486
    %v611 = vpack.c.b16 %v489, %v487
    %v612 = vpack.c.b16 %v492, %v490
    %v613 = vpack.c.b16 %v493, %v491
    %v614 = vpack.c.b16 %v496, %v494
    %v615 = vpack.c.b16 %v497, %v495
    %v616 = vpack.c.b16 %v500, %v498
    %v617 = vpack.c.b16 %v501, %v499
    %v618 = vpack.c.b16 %v504, %v502
    %v619 = vpack.c.b16 %v505, %v503
    %v620 = vpack.c.b16 %v508, %v506
    %v621 = vpack.c.b16 %v509, %v507
    %v622 = vpack.c.b16 %v512, %v510
    %v623 = vpack.c.b16 %v513, %v511
    %v624 = vpack.c.b16 %v516, %v514
    %v625 = vpack.c.b16 %v517, %v515
    %v626 = vpack.c.b16 %v520, %v518
    %v627 = vpack.c.b16 %v521, %v519
    %v628 = vpack.c.b16 %v524, %v522
    %v629 = vpack.c.b16 %v525, %v523
    %v630 = vpack.c.b16 %v528, %v526
    %v631 = vpack.c.b16 %v529, %v527
    %v632 = vpack.c.b16 %v532, %v530
    %v633 = vpack.c.b16 %v533, %v531
    %v634 = vpack.c.b16 %v536, %v534
    %v635 = vpack.c.b16 %v537, %v535
    %vm734 = vcmask 130048
    %v736 = vsel %vm734, %v133, 0
    %738 = vmatprep.subr.bf16.mxu0 %v553
    %739 = vmatpush1.bf16.msra.mxu0 %v552
    %740 = vmatprep.subr.bf16.mxu0 %v551
    %741 = vmatpush1.bf16.msra.mxu0 %v550
    %742 = vmatprep.subr.bf16.mxu0 %v549
    %743 = vmatpush1.bf16.msra.mxu0 %v548
    %744 = vmatprep.subr.bf16.mxu0 %v547
    %745 = vmatpush1.bf16.msra.mxu0 %v546
    %746 = vmatprep.subr.bf16.mxu0 %v545
    %747 = vmatpush1.bf16.msra.mxu0 %v544
    %748 = vmatprep.subr.bf16.mxu0 %v543
    %749 = vmatpush1.bf16.msra.mxu0 %v542
    %750 = vmatprep.subr.bf16.mxu0 %v541
    %751 = vmatpush1.bf16.msra.mxu0 %v540
    %752 = vmatprep.subr.bf16.mxu0 %v539
    %753 = vmatpush1.bf16.msra.mxu0 %v538
    %754 = vmatprep.subr.bf16.mxu0 %v569
    %755 = vmatpush2.bf16.msra.mxu0 %v568
    %756 = vmatprep.subr.bf16.mxu0 %v567
    %757 = vmatpush2.bf16.msra.mxu0 %v566
    %758 = vmatprep.subr.bf16.mxu0 %v565
    %759 = vmatpush2.bf16.msra.mxu0 %v564
    %760 = vmatprep.subr.bf16.mxu0 %v563
    %761 = vmatpush2.bf16.msra.mxu0 %v562
    %762 = vmatprep.subr.bf16.mxu0 %v561
    %763 = vmatpush2.bf16.msra.mxu0 %v560
    %764 = vmatprep.subr.bf16.mxu0 %v559
    %765 = vmatpush2.bf16.msra.mxu0 %v558
    %766 = vmatprep.subr.bf16.mxu0 %v557
    %767 = vmatpush2.bf16.msra.mxu0 %v556
    %768 = vmatprep.subr.bf16.mxu0 %v555
    %769 = vmatpush2.bf16.msra.mxu0 %v554
    %770 = vmatprep.mubr.bf16.mxu0 %v128
    %771 = vmatmul.mubr.bf16.gmra.mxu0 %v127
    %v772 = vpop.f32.mrf.mxu0
    %v773 = vadd.f32 %v237, %v772
    %v774 = vpop.f32.mrf.mxu0
    %v775 = vadd.f32 %v241, %v774
    %v776 = vpop.f32.mrf.mxu0
    %v777 = vpop.f32.mrf.mxu0
    %778 = vdwg.mxu0
    %779 = vmatprep.subr.bf16.mxu0 %v585
    %780 = vmatpush1.bf16.msra.mxu0 %v584
    %781 = vmatprep.subr.bf16.mxu0 %v583
    %782 = vmatpush1.bf16.msra.mxu0 %v582
    %783 = vmatprep.subr.bf16.mxu0 %v581
    %784 = vmatpush1.bf16.msra.mxu0 %v580
    %785 = vmatprep.subr.bf16.mxu0 %v579
    %786 = vmatpush1.bf16.msra.mxu0 %v578
    %787 = vmatprep.subr.bf16.mxu0 %v577
    %788 = vmatpush1.bf16.msra.mxu0 %v576
    %789 = vmatprep.subr.bf16.mxu0 %v575
    %790 = vmatpush1.bf16.msra.mxu0 %v574
    %791 = vmatprep.subr.bf16.mxu0 %v573
    %792 = vmatpush1.bf16.msra.mxu0 %v572
    %793 = vmatprep.subr.bf16.mxu0 %v571
    %794 = vmatpush1.bf16.msra.mxu0 %v570
    %795 = vmatprep.subr.bf16.mxu0 %v601
    %796 = vmatpush2.bf16.msra.mxu0 %v600
    %797 = vmatprep.subr.bf16.mxu0 %v599
    %798 = vmatpush2.bf16.msra.mxu0 %v598
    %799 = vmatprep.subr.bf16.mxu0 %v597
    %800 = vmatpush2.bf16.msra.mxu0 %v596
    %801 = vmatprep.subr.bf16.mxu0 %v595
    %802 = vmatpush2.bf16.msra.mxu0 %v594
    %803 = vmatprep.subr.bf16.mxu0 %v593
    %804 = vmatpush2.bf16.msra.mxu0 %v592
    %805 = vmatprep.subr.bf16.mxu0 %v591
    %806 = vmatpush2.bf16.msra.mxu0 %v590
    %807 = vmatprep.subr.bf16.mxu0 %v589
    %808 = vmatpush2.bf16.msra.mxu0 %v588
    %809 = vmatprep.subr.bf16.mxu0 %v587
    %810 = vmatpush2.bf16.msra.mxu0 %v586
    %811 = vmatprep.mubr.bf16.mxu0 %v130
    %812 = vmatmul.mubr.bf16.gmra.mxu0 %v129
    %v813 = vpop.f32.mrf.mxu0
    %v814 = vadd.f32 %v773, %v813
    %v815 = vpop.f32.mrf.mxu0
    %v816 = vadd.f32 %v775, %v815
    %v817 = vpop.f32.mrf.mxu0
    %v818 = vpop.f32.mrf.mxu0
    %819 = vdwg.mxu0
    %820 = vmatprep.subr.bf16.mxu0 %v617
    %821 = vmatpush1.bf16.msra.mxu0 %v616
    %822 = vmatprep.subr.bf16.mxu0 %v615
    %823 = vmatpush1.bf16.msra.mxu0 %v614
    %824 = vmatprep.subr.bf16.mxu0 %v613
    %825 = vmatpush1.bf16.msra.mxu0 %v612
    %826 = vmatprep.subr.bf16.mxu0 %v611
    %827 = vmatpush1.bf16.msra.mxu0 %v610
    %828 = vmatprep.subr.bf16.mxu0 %v609
    %829 = vmatpush1.bf16.msra.mxu0 %v608
    %830 = vmatprep.subr.bf16.mxu0 %v607
    %831 = vmatpush1.bf16.msra.mxu0 %v606
    %832 = vmatprep.subr.bf16.mxu0 %v605
    %833 = vmatpush1.bf16.msra.mxu0 %v604
    %834 = vmatprep.subr.bf16.mxu0 %v603
    %835 = vmatpush1.bf16.msra.mxu0 %v602
    %836 = vmatprep.subr.bf16.mxu0 %v633
    %837 = vmatpush2.bf16.msra.mxu0 %v632
    %838 = vmatprep.subr.bf16.mxu0 %v631
    %839 = vmatpush2.bf16.msra.mxu0 %v630
    %840 = vmatprep.subr.bf16.mxu0 %v629
    %841 = vmatpush2.bf16.msra.mxu0 %v628
    %842 = vmatprep.subr.bf16.mxu0 %v627
    %843 = vmatpush2.bf16.msra.mxu0 %v626
    %844 = vmatprep.subr.bf16.mxu0 %v625
    %845 = vmatpush2.bf16.msra.mxu0 %v624
    %846 = vmatprep.subr.bf16.mxu0 %v623
    %847 = vmatpush2.bf16.msra.mxu0 %v622
    %848 = vmatprep.subr.bf16.mxu0 %v621
    %849 = vmatpush2.bf16.msra.mxu0 %v620
    %850 = vmatprep.subr.bf16.mxu0 %v619
    %851 = vmatpush2.bf16.msra.mxu0 %v618
    %852 = vmatprep.mubr.bf16.mxu0 %v132
    %853 = vmatmul.mubr.bf16.gmra.mxu0 %v131
    %v854 = vpop.f32.mrf.mxu0
    %v855 = vadd.f32 %v814, %v854
    %v856 = vpop.f32.mrf.mxu0
    %v857 = vadd.f32 %v816, %v856
    %v858 = vpop.f32.mrf.mxu0
    %v859 = vpop.f32.mrf.mxu0
    %860 = vdwg.mxu0
    %861 = vmatprep.subr.bf16.mxu0 0
    %862 = vmatpush1.bf16.msra.mxu0 0
    %863 = vmatprep.subr.bf16.mxu0 0
    %864 = vmatpush1.bf16.msra.mxu0 0
    %865 = vmatprep.subr.bf16.mxu0 0
    %866 = vmatpush1.bf16.msra.mxu0 0
    %867 = vmatprep.subr.bf16.mxu0 0
    %868 = vmatpush1.bf16.msra.mxu0 0
    %869 = vmatprep.subr.bf16.mxu0 0
    %870 = vmatpush1.bf16.msra.mxu0 0
    %871 = vmatprep.subr.bf16.mxu0 0
    %872 = vmatpush1.bf16.msra.mxu0 0
    %873 = vmatprep.subr.bf16.mxu0 0
    %874 = vmatpush1.bf16.msra.mxu0 0
    %875 = vmatprep.subr.bf16.mxu0 %v635
    %876 = vmatpush1.bf16.msra.mxu0 %v634
    %877 = vmatprep.subr.bf16.mxu0 0
    %878 = vmatpush2.bf16.msra.mxu0 0
    %879 = vmatprep.subr.bf16.mxu0 0
    %880 = vmatpush2.bf16.msra.mxu0 0
    %881 = vmatprep.subr.bf16.mxu0 0
    %882 = vmatpush2.bf16.msra.mxu0 0
    %883 = vmatprep.subr.bf16.mxu0 0
    %884 = vmatpush2.bf16.msra.mxu0 0
    %885 = vmatprep.subr.bf16.mxu0 0
    %886 = vmatpush2.bf16.msra.mxu0 0
    %887 = vmatprep.subr.bf16.mxu0 0
    %888 = vmatpush2.bf16.msra.mxu0 0
    %889 = vmatprep.subr.bf16.mxu0 0
    %890 = vmatpush2.bf16.msra.mxu0 0
    %891 = vmatprep.subr.bf16.mxu0 0
    %892 = vmatpush2.bf16.msra.mxu0 0
    %893 = vmatprep.mubr.bf16.mxu0 0
    %894 = vmatmul.mubr.bf16.gmra.mxu0 %v736
    %v895 = vpop.f32.mrf.mxu0
    %v896 = vadd.f32 %v855, %v895
    %v897 = vpop.f32.mrf.mxu0
    %v898 = vadd.f32 %v857, %v897
    %v899 = vpop.f32.mrf.mxu0
    %v900 = vpop.f32.mrf.mxu0
    %901 = vdwg.mxu0
    %v902 = vmax.f32 %v896, 0.0
    %v903 = vmax.f32 %v898, 0.0
    %v904 = vpack.c.bf16 %v902, %v902
    %v905 = vpack.c.bf16 %v903, %v903
    %v906 = vld [vmem:[#allocation7] sm:$0xf]
    %v907 = vld [vmem:[#allocation7 + $0x4] sm:$0xf]
    %v908 = vld [vmem:[#allocation7 + $0x8] sm:$0xf]
    %v909 = vld [vmem:[#allocation7 + $0xc] sm:$0xf]
    %v910 = vld [vmem:[#allocation7 + $0x10] sm:$0xf]
    %v911 = vld [vmem:[#allocation7 + $0x14] sm:$0xf]
    %v912 = vld [vmem:[#allocation7 + $0x18] sm:$0xf]
    %v913 = vld [vmem:[#allocation7 + $0x1c] sm:$0xf]
    %v914 = vld [vmem:[#allocation7 + $0x20] sm:$0xf]
    %v915 = vld [vmem:[#allocation7 + $0x24] sm:$0xf]
    %v916 = vld [vmem:[#allocation7 + $0x28] sm:$0xf]
    %v917 = vld [vmem:[#allocation7 + $0x2c] sm:$0xf]
    %v918 = vld [vmem:[#allocation7 + $0x30] sm:$0xf]
    %v919 = vld [vmem:[#allocation7 + $0x34] sm:$0xf]
    %v920 = vld [vmem:[#allocation7 + $0x38] sm:$0xf]
    %v921 = vld [vmem:[#allocation7 + $0x3c] sm:$0xf]
    %v922 = vld [vmem:[#allocation7 + $0x40] sm:$0xf]
    %v923 = vld [vmem:[#allocation7 + $0x44] sm:$0xf]
    %v924 = vld [vmem:[#allocation7 + $0x48] sm:$0xf]
    %v925 = vld [vmem:[#allocation7 + $0x4c] sm:$0xf]
    %v926 = vld [vmem:[#allocation7 + $0x50] sm:$0xf]
    %v927 = vld [vmem:[#allocation7 + $0x54] sm:$0xf]
    %v928 = vld [vmem:[#allocation7 + $0x58] sm:$0xf]
    %v929 = vld [vmem:[#allocation7 + $0x5c] sm:$0xf]
    %v930 = vld [vmem:[#allocation7 + $0x60] sm:$0xf]
    %v931 = vld [vmem:[#allocation7 + $0x64] sm:$0xf]
    %v932 = vld [vmem:[#allocation7 + $0x68] sm:$0xf]
    %v933 = vld [vmem:[#allocation7 + $0x6c] sm:$0xf]
    %v934 = vld [vmem:[#allocation7 + $0x70] sm:$0xf]
    %v935 = vld [vmem:[#allocation7 + $0x74] sm:$0xf]
    %v936 = vld [vmem:[#allocation7 + $0x78] sm:$0xf]
    %v937 = vld [vmem:[#allocation7 + $0x7c] sm:$0xf]
    %v938 = vld [vmem:[%s4] sm:$0x1]
    %v940 = vlaneseq
    %v941 = vshrl.u32 %v940, 7
    %v942 = vsub.s32 0, %v941
    %v943 = vrot.slane %v938, %v942
    %v977 = vunpack.c.l.b16 %v906
    %v978 = vunpack.c.l.b16 %v907
    %v979 = vunpack.c.l.b16 %v908
    %v980 = vunpack.c.l.b16 %v909
    %v981 = vunpack.c.l.b16 %v910
    %v982 = vunpack.c.l.b16 %v911
    %v983 = vunpack.c.l.b16 %v912
    %v984 = vunpack.c.l.b16 %v913
    %v985 = vunpack.c.l.b16 %v914
    %v986 = vunpack.c.l.b16 %v915
    %v987 = vunpack.c.l.b16 %v916
    %v988 = vunpack.c.l.b16 %v917
    %v989 = vunpack.c.l.b16 %v918
    %v990 = vunpack.c.l.b16 %v919
    %v991 = vunpack.c.l.b16 %v920
    %v992 = vunpack.c.l.b16 %v921
    %v993 = vunpack.c.l.b16 %v922
    %v994 = vunpack.c.l.b16 %v923
    %v995 = vunpack.c.l.b16 %v924
    %v996 = vunpack.c.l.b16 %v925
    %v997 = vunpack.c.l.b16 %v926
    %v998 = vunpack.c.l.b16 %v927
    %v999 = vunpack.c.l.b16 %v928
    %v1000 = vunpack.c.l.b16 %v929
    %v1001 = vunpack.c.l.b16 %v930
    %v1002 = vunpack.c.l.b16 %v931
    %v1003 = vunpack.c.l.b16 %v932
    %v1004 = vunpack.c.l.b16 %v933
    %v1005 = vunpack.c.l.b16 %v934
    %v1006 = vunpack.c.l.b16 %v935
    %v1007 = vunpack.c.l.b16 %v936
    %v1008 = vunpack.c.l.b16 %v937
    %v1009 = vpack.c.b16 %v978, %v977
    %v1010 = vpack.c.b16 %v980, %v979
    %v1011 = vpack.c.b16 %v982, %v981
    %v1012 = vpack.c.b16 %v984, %v983
    %v1013 = vpack.c.b16 %v986, %v985
    %v1014 = vpack.c.b16 %v988, %v987
    %v1015 = vpack.c.b16 %v990, %v989
    %v1016 = vpack.c.b16 %v992, %v991
    %v1017 = vpack.c.b16 %v994, %v993
    %v1018 = vpack.c.b16 %v996, %v995
    %v1019 = vpack.c.b16 %v998, %v997
    %v1020 = vpack.c.b16 %v1000, %v999
    %v1021 = vpack.c.b16 %v1002, %v1001
    %v1022 = vpack.c.b16 %v1004, %v1003
    %v1023 = vpack.c.b16 %v1006, %v1005
    %v1024 = vpack.c.b16 %v1008, %v1007
    %1041 = vmatprep.subr.bf16.mxu0 0
    %1042 = vmatpush1.bf16.msra.mxu0 %v1016
    %1043 = vmatprep.subr.bf16.mxu0 0
    %1044 = vmatpush1.bf16.msra.mxu0 %v1015
    %1045 = vmatprep.subr.bf16.mxu0 0
    %1046 = vmatpush1.bf16.msra.mxu0 %v1014
    %1047 = vmatprep.subr.bf16.mxu0 0
    %1048 = vmatpush1.bf16.msra.mxu0 %v1013
    %1049 = vmatprep.subr.bf16.mxu0 0
    %1050 = vmatpush1.bf16.msra.mxu0 %v1012
    %1051 = vmatprep.subr.bf16.mxu0 0
    %1052 = vmatpush1.bf16.msra.mxu0 %v1011
    %1053 = vmatprep.subr.bf16.mxu0 0
    %1054 = vmatpush1.bf16.msra.mxu0 %v1010
    %1055 = vmatprep.subr.bf16.mxu0 0
    %1056 = vmatpush1.bf16.msra.mxu0 %v1009
    %1057 = vmatprep.subr.bf16.mxu0 0
    %1058 = vmatpush2.bf16.msra.mxu0 %v1024
    %1059 = vmatprep.subr.bf16.mxu0 0
    %1060 = vmatpush2.bf16.msra.mxu0 %v1023
    %1061 = vmatprep.subr.bf16.mxu0 0
    %1062 = vmatpush2.bf16.msra.mxu0 %v1022
    %1063 = vmatprep.subr.bf16.mxu0 0
    %1064 = vmatpush2.bf16.msra.mxu0 %v1021
    %1065 = vmatprep.subr.bf16.mxu0 0
    %1066 = vmatpush2.bf16.msra.mxu0 %v1020
    %1067 = vmatprep.subr.bf16.mxu0 0
    %1068 = vmatpush2.bf16.msra.mxu0 %v1019
    %1069 = vmatprep.subr.bf16.mxu0 0
    %1070 = vmatpush2.bf16.msra.mxu0 %v1018
    %1071 = vmatprep.subr.bf16.mxu0 0
    %1072 = vmatpush2.bf16.msra.mxu0 %v1017
    %1073 = vmatprep.mubr.bf16.mxu0 %v905
    %1074 = vmatmul.mubr.bf16.gmra.mxu0 %v904
    %v1075 = vpop.f32.mrf.mxu0
    %v1076 = vadd.f32 %v943, %v1075
    %v1077 = vpop.f32.mrf.mxu0
    %v1078 = vpop.f32.mrf.mxu0
    %v1079 = vpop.f32.mrf.mxu0
    %1080 = vdwg.mxu0
    %v1081 = vmax.f32 %v1076, 0.0
    %v1082 = vpack.c.bf16 %v1081, %v1081
    %v1083 = vld [vmem:[#allocation8] sm:$0xf]
    %v1084 = vld [vmem:[#allocation8 + $0x4] sm:$0xf]
    %v1085 = vld [vmem:[#allocation8 + $0x8] sm:$0xf]
    %v1086 = vld [vmem:[#allocation8 + $0xc] sm:$0xf]
    %v1087 = vld [vmem:[#allocation8 + $0x10] sm:$0xf]
    %v1088 = vld [vmem:[#allocation8 + $0x14] sm:$0xf]
    %v1089 = vld [vmem:[#allocation8 + $0x18] sm:$0xf]
    %v1090 = vld [vmem:[#allocation8 + $0x1c] sm:$0xf]
    %v1091 = vld [vmem:[#allocation8 + $0x20] sm:$0xf]
    %v1092 = vld [vmem:[#allocation8 + $0x24] sm:$0xf]
    %v1093 = vld [vmem:[#allocation8 + $0x28] sm:$0xf]
    %v1094 = vld [vmem:[#allocation8 + $0x2c] sm:$0xf]
    %v1095 = vld [vmem:[#allocation8 + $0x30] sm:$0xf]
    %v1096 = vld [vmem:[#allocation8 + $0x34] sm:$0xf]
    %v1097 = vld [vmem:[#allocation8 + $0x38] sm:$0xf]
    %v1098 = vld [vmem:[#allocation8 + $0x3c] sm:$0xf]
    %v1099 = vld [vmem:[%s6] sm:$0x1]
    %v1101 = vlaneseq
    %v1102 = vshrl.u32 %v1101, 7
    %v1103 = vsub.s32 0, %v1102
    %v1104 = vrot.slane %v1099, %v1103
    %v1122 = vunpack.c.l.b16 %v1083
    %v1123 = vunpack.c.l.b16 %v1084
    %v1124 = vunpack.c.l.b16 %v1085
    %v1125 = vunpack.c.l.b16 %v1086
    %v1126 = vunpack.c.l.b16 %v1087
    %v1127 = vunpack.c.l.b16 %v1088
    %v1128 = vunpack.c.l.b16 %v1089
    %v1129 = vunpack.c.l.b16 %v1090
    %v1130 = vunpack.c.l.b16 %v1091
    %v1131 = vunpack.c.l.b16 %v1092
    %v1132 = vunpack.c.l.b16 %v1093
    %v1133 = vunpack.c.l.b16 %v1094
    %v1134 = vunpack.c.l.b16 %v1095
    %v1135 = vunpack.c.l.b16 %v1096
    %v1136 = vunpack.c.l.b16 %v1097
    %v1137 = vunpack.c.l.b16 %v1098
    %v1138 = vpack.c.b16 %v1123, %v1122
    %v1139 = vpack.c.b16 %v1125, %v1124
    %v1140 = vpack.c.b16 %v1127, %v1126
    %v1141 = vpack.c.b16 %v1129, %v1128
    %v1142 = vpack.c.b16 %v1131, %v1130
    %v1143 = vpack.c.b16 %v1133, %v1132
    %v1144 = vpack.c.b16 %v1135, %v1134
    %v1145 = vpack.c.b16 %v1137, %v1136
    %1154 = vmatprep.subr.bf16.mxu0 0
    %1155 = vmatpush1.bf16.msra.mxu0 %v1145
    %1156 = vmatprep.subr.bf16.mxu0 0
    %1157 = vmatpush1.bf16.msra.mxu0 %v1144
    %1158 = vmatprep.subr.bf16.mxu0 0
    %1159 = vmatpush1.bf16.msra.mxu0 %v1143
    %1160 = vmatprep.subr.bf16.mxu0 0
    %1161 = vmatpush1.bf16.msra.mxu0 %v1142
    %1162 = vmatprep.subr.bf16.mxu0 0
    %1163 = vmatpush1.bf16.msra.mxu0 %v1141
    %1164 = vmatprep.subr.bf16.mxu0 0
    %1165 = vmatpush1.bf16.msra.mxu0 %v1140
    %1166 = vmatprep.subr.bf16.mxu0 0
    %1167 = vmatpush1.bf16.msra.mxu0 %v1139
    %1168 = vmatprep.subr.bf16.mxu0 0
    %1169 = vmatpush1.bf16.msra.mxu0 %v1138
    %1170 = vmatprep.subr.bf16.mxu0 0
    %1171 = vmatpush2.bf16.msra.mxu0 0
    %1172 = vmatprep.subr.bf16.mxu0 0
    %1173 = vmatpush2.bf16.msra.mxu0 0
    %1174 = vmatprep.subr.bf16.mxu0 0
    %1175 = vmatpush2.bf16.msra.mxu0 0
    %1176 = vmatprep.subr.bf16.mxu0 0
    %1177 = vmatpush2.bf16.msra.mxu0 0
    %1178 = vmatprep.subr.bf16.mxu0 0
    %1179 = vmatpush2.bf16.msra.mxu0 0
    %1180 = vmatprep.subr.bf16.mxu0 0
    %1181 = vmatpush2.bf16.msra.mxu0 0
    %1182 = vmatprep.subr.bf16.mxu0 0
    %1183 = vmatpush2.bf16.msra.mxu0 0
    %1184 = vmatprep.subr.bf16.mxu0 0
    %1185 = vmatpush2.bf16.msra.mxu0 0
    %1186 = vmatprep.mubr.bf16.mxu0 0
    %1187 = vmatmul.mubr.bf16.gmra.mxu0 %v1082
    %v1188 = vpop.f32.mrf.mxu0
    %v1189 = vadd.f32 %v1104, %v1188
    %v1190 = vpop.f32.mrf.mxu0
    %v1191 = vpop.f32.mrf.mxu0
    %v1192 = vpop.f32.mrf.mxu0
    %1193 = vdwg.mxu0
    %v1194 = vmax.f32 %v1189, 0.0
    %v1195 = vpack.c.bf16 %v1194, %v1194
    %v1196 = vld [vmem:[#allocation10] sm:$0xf]
    %v1197 = vld [vmem:[#allocation10 + $0x4] sm:$0xf]
    %v1198 = vld [vmem:[#allocation10 + $0x8] sm:$0xf]
    %v1199 = vld [vmem:[#allocation10 + $0xc] sm:$0xf]
    %v1200 = vld [vmem:[#allocation10 + $0x10] sm:$0xf]
    %v1201 = vld [vmem:[#allocation10 + $0x14] sm:$0xf]
    %v1202 = vld [vmem:[#allocation10 + $0x18] sm:$0xf]
    %v1203 = vld [vmem:[#allocation10 + $0x1c] sm:$0xf]
    %v1204 = vld [vmem:[#allocation10 + $0x20] sm:$0xf]
    %v1205 = vld [vmem:[#allocation10 + $0x24] sm:$0xf]
    %v1206 = vld [vmem:[#allocation10 + $0x28] sm:$0xf]
    %v1207 = vld [vmem:[#allocation10 + $0x2c] sm:$0xf]
    %v1208 = vld [vmem:[#allocation10 + $0x30] sm:$0xf]
    %v1209 = vld [vmem:[#allocation10 + $0x34] sm:$0xf]
    %v1210 = vld [vmem:[#allocation10 + $0x38] sm:$0xf]
    %v1211 = vld [vmem:[#allocation10 + $0x3c] sm:$0xf]
    %v1212 = vld [vmem:[%s8] sm:$0x1]
    %v1214 = vlaneseq
    %v1215 = vshrl.u32 %v1214, 7
    %v1216 = vsub.s32 0, %v1215
    %v1217 = vrot.slane %v1212, %v1216
    %v1235 = vunpack.c.l.b16 %v1196
    %v1236 = vunpack.c.l.b16 %v1197
    %v1237 = vunpack.c.l.b16 %v1198
    %v1238 = vunpack.c.l.b16 %v1199
    %v1239 = vunpack.c.l.b16 %v1200
    %v1240 = vunpack.c.l.b16 %v1201
    %v1241 = vunpack.c.l.b16 %v1202
    %v1242 = vunpack.c.l.b16 %v1203
    %v1243 = vunpack.c.l.b16 %v1204
    %v1244 = vunpack.c.l.b16 %v1205
    %v1245 = vunpack.c.l.b16 %v1206
    %v1246 = vunpack.c.l.b16 %v1207
    %v1247 = vunpack.c.l.b16 %v1208
    %v1248 = vunpack.c.l.b16 %v1209
    %v1249 = vunpack.c.l.b16 %v1210
    %v1250 = vunpack.c.l.b16 %v1211
    %v1251 = vpack.c.b16 %v1236, %v1235
    %v1252 = vpack.c.b16 %v1238, %v1237
    %v1253 = vpack.c.b16 %v1240, %v1239
    %v1254 = vpack.c.b16 %v1242, %v1241
    %v1255 = vpack.c.b16 %v1244, %v1243
    %v1256 = vpack.c.b16 %v1246, %v1245
    %v1257 = vpack.c.b16 %v1248, %v1247
    %v1258 = vpack.c.b16 %v1250, %v1249
    %1267 = vmatprep.subr.bf16.mxu0 0
    %1268 = vmatpush1.bf16.msra.mxu0 %v1258
    %1269 = vmatprep.subr.bf16.mxu0 0
    %1270 = vmatpush1.bf16.msra.mxu0 %v1257
    %1271 = vmatprep.subr.bf16.mxu0 0
    %1272 = vmatpush1.bf16.msra.mxu0 %v1256
    %1273 = vmatprep.subr.bf16.mxu0 0
    %1274 = vmatpush1.bf16.msra.mxu0 %v1255
    %1275 = vmatprep.subr.bf16.mxu0 0
    %1276 = vmatpush1.bf16.msra.mxu0 %v1254
    %1277 = vmatprep.subr.bf16.mxu0 0
    %1278 = vmatpush1.bf16.msra.mxu0 %v1253
    %1279 = vmatprep.subr.bf16.mxu0 0
    %1280 = vmatpush1.bf16.msra.mxu0 %v1252
    %1281 = vmatprep.subr.bf16.mxu0 0
    %1282 = vmatpush1.bf16.msra.mxu0 %v1251
    %1283 = vmatprep.subr.bf16.mxu0 0
    %1284 = vmatpush2.bf16.msra.mxu0 0
    %1285 = vmatprep.subr.bf16.mxu0 0
    %1286 = vmatpush2.bf16.msra.mxu0 0
    %1287 = vmatprep.subr.bf16.mxu0 0
    %1288 = vmatpush2.bf16.msra.mxu0 0
    %1289 = vmatprep.subr.bf16.mxu0 0
    %1290 = vmatpush2.bf16.msra.mxu0 0
    %1291 = vmatprep.subr.bf16.mxu0 0
    %1292 = vmatpush2.bf16.msra.mxu0 0
    %1293 = vmatprep.subr.bf16.mxu0 0
    %1294 = vmatpush2.bf16.msra.mxu0 0
    %1295 = vmatprep.subr.bf16.mxu0 0
    %1296 = vmatpush2.bf16.msra.mxu0 0
    %1297 = vmatprep.subr.bf16.mxu0 0
    %1298 = vmatpush2.bf16.msra.mxu0 0
    %1299 = vmatprep.mubr.bf16.mxu0 0
    %1300 = vmatmul.mubr.bf16.gmra.mxu0 %v1195
    %v1301 = vpop.f32.mrf.mxu0
    %v1302 = vadd.f32 %v1217, %v1301
    %v1303 = vpop.f32.mrf.mxu0
    %v1304 = vpop.f32.mrf.mxu0
    %v1305 = vpop.f32.mrf.mxu0
    %1306 = vdwg.mxu0
    %v1307 = vmax.f32 %v1302, 0.0
    %v1308 = vpack.c.bf16 %v1307, %v1307
    %v1309 = vld [vmem:[#allocation11] sm:$0xf]
    %v1310 = vld [vmem:[#allocation11 + $0x4] sm:$0xf]
    %v1311 = vld [vmem:[#allocation11 + $0x8] sm:$0xf]
    %v1312 = vld [vmem:[#allocation11 + $0xc] sm:$0xf]
    %v1313 = vld [vmem:[#allocation11 + $0x10] sm:$0xf]
    %v1314 = vld [vmem:[#allocation11 + $0x14] sm:$0xf]
    %v1315 = vld [vmem:[#allocation11 + $0x18] sm:$0xf]
    %v1316 = vld [vmem:[#allocation11 + $0x1c] sm:$0xf]
    %v1317 = vld [vmem:[#allocation11 + $0x20] sm:$0xf]
    %v1318 = vld [vmem:[#allocation11 + $0x24] sm:$0xf]
    %v1319 = vld [vmem:[#allocation11 + $0x28] sm:$0xf]
    %v1320 = vld [vmem:[#allocation11 + $0x2c] sm:$0xf]
    %v1321 = vld [vmem:[#allocation11 + $0x30] sm:$0xf]
    %v1322 = vld [vmem:[#allocation11 + $0x34] sm:$0xf]
    %v1323 = vld [vmem:[#allocation11 + $0x38] sm:$0xf]
    %v1324 = vld [vmem:[#allocation11 + $0x3c] sm:$0xf]
    %v1325 = vld [vmem:[%s10] sm:$0x1]
    %v1327 = vlaneseq
    %v1328 = vshrl.u32 %v1327, 7
    %v1329 = vsub.s32 0, %v1328
    %v1330 = vrot.slane %v1325, %v1329
    %v1348 = vunpack.c.l.b16 %v1309
    %v1349 = vunpack.c.l.b16 %v1310
    %v1350 = vunpack.c.l.b16 %v1311
    %v1351 = vunpack.c.l.b16 %v1312
    %v1352 = vunpack.c.l.b16 %v1313
    %v1353 = vunpack.c.l.b16 %v1314
    %v1354 = vunpack.c.l.b16 %v1315
    %v1355 = vunpack.c.l.b16 %v1316
    %v1356 = vunpack.c.l.b16 %v1317
    %v1357 = vunpack.c.l.b16 %v1318
    %v1358 = vunpack.c.l.b16 %v1319
    %v1359 = vunpack.c.l.b16 %v1320
    %v1360 = vunpack.c.l.b16 %v1321
    %v1361 = vunpack.c.l.b16 %v1322
    %v1362 = vunpack.c.l.b16 %v1323
    %v1363 = vunpack.c.l.b16 %v1324
    %v1364 = vpack.c.b16 %v1349, %v1348
    %v1365 = vpack.c.b16 %v1351, %v1350
    %v1366 = vpack.c.b16 %v1353, %v1352
    %v1367 = vpack.c.b16 %v1355, %v1354
    %v1368 = vpack.c.b16 %v1357, %v1356
    %v1369 = vpack.c.b16 %v1359, %v1358
    %v1370 = vpack.c.b16 %v1361, %v1360
    %v1371 = vpack.c.b16 %v1363, %v1362
    %1380 = vmatprep.subr.bf16.mxu0 0
    %1381 = vmatpush1.bf16.msra.mxu0 %v1371
    %1382 = vmatprep.subr.bf16.mxu0 0
    %1383 = vmatpush1.bf16.msra.mxu0 %v1370
    %1384 = vmatprep.subr.bf16.mxu0 0
    %1385 = vmatpush1.bf16.msra.mxu0 %v1369
    %1386 = vmatprep.subr.bf16.mxu0 0
    %1387 = vmatpush1.bf16.msra.mxu0 %v1368
    %1388 = vmatprep.subr.bf16.mxu0 0
    %1389 = vmatpush1.bf16.msra.mxu0 %v1367
    %1390 = vmatprep.subr.bf16.mxu0 0
    %1391 = vmatpush1.bf16.msra.mxu0 %v1366
    %1392 = vmatprep.subr.bf16.mxu0 0
    %1393 = vmatpush1.bf16.msra.mxu0 %v1365
    %1394 = vmatprep.subr.bf16.mxu0 0
    %1395 = vmatpush1.bf16.msra.mxu0 %v1364
    %1396 = vmatprep.subr.bf16.mxu0 0
    %1397 = vmatpush2.bf16.msra.mxu0 0
    %1398 = vmatprep.subr.bf16.mxu0 0
    %1399 = vmatpush2.bf16.msra.mxu0 0
    %1400 = vmatprep.subr.bf16.mxu0 0
    %1401 = vmatpush2.bf16.msra.mxu0 0
    %1402 = vmatprep.subr.bf16.mxu0 0
    %1403 = vmatpush2.bf16.msra.mxu0 0
    %1404 = vmatprep.subr.bf16.mxu0 0
    %1405 = vmatpush2.bf16.msra.mxu0 0
    %1406 = vmatprep.subr.bf16.mxu0 0
    %1407 = vmatpush2.bf16.msra.mxu0 0
    %1408 = vmatprep.subr.bf16.mxu0 0
    %1409 = vmatpush2.bf16.msra.mxu0 0
    %1410 = vmatprep.subr.bf16.mxu0 0
    %1411 = vmatpush2.bf16.msra.mxu0 0
    %1412 = vmatprep.mubr.bf16.mxu0 0
    %1413 = vmatmul.mubr.bf16.gmra.mxu0 %v1308
    %v1414 = vpop.f32.mrf.mxu0
    %v1415 = vadd.f32 %v1330, %v1414
    %v1416 = vpop.f32.mrf.mxu0
    %v1417 = vpop.f32.mrf.mxu0
    %v1418 = vpop.f32.mrf.mxu0
    %1419 = vdwg.mxu0
    %1420 = vmax.xlane.f32.xlu0 %v1415
    %v1421 = vpop.xlane.xlu0 %1420
    %v1422 = vsub.f32 %v1415, %v1421
    %v1423 = vmul.f32 %v1422, 1.442695
    %v1424 = vpow.pop %v1423
    %1425 = vadd.xlane.f32.xlu0 %v1424
    %v1426 = vpop.xlane.xlu0 %1425
    %v1427 = vrcp.pop %v1426
    %v1428 = vmul.f32 %v1424, %v1427
    %1429 = vst [vmem:[#allocation13] sm:$0xff] %v1428
    // Predicated region
    $region70: #{tpu_custom_call.1} parent=1 // pred_check
      _
    $region71: #{tpu_custom_call.1} parent=1 // pred_check_branch
      %1431 = sbr.rel (0) target = $region73
    $region72: #{tpu_custom_call.1} parent=1 // pred_region
      %s1433 = ssub.s32 128, 128
      %1434 = vsyncadd [#allocation4], %s1433
      %s1436 = sshll.u32 [#allocation13], 4
      %s1437 = int_to_ptr.vmem [resolvable:$true] %s1436
      %1439 = dma.vmem_to_hbm [thread:$0]  %s1437, 128, %s11, [#allocation4]
    $region73: #{tpu_custom_call.1} parent=1 // pred_fallthru
      _
    // Predicated region
    $region74: #{tpu_custom_call.1} parent=1 // pred_check
      _
    $region75: #{tpu_custom_call.1} parent=1 // pred_check_branch
      %1441 = sbr.rel (0) target = $region77
    $region76: #{tpu_custom_call.1} parent=1 // pred_region
      %1442 = dma.done [#allocation4], 128
    $region77: #{tpu_custom_call.1} parent=1 // pred_fallthru
      _
    %1443 = vsyncpa [#allocation3], 1
    %1444 = vsyncpa [#allocation6], 1
    %1445 = vsyncpa [#allocation9], 1
    %1446 = vsyncpa [#allocation12], 1
    %1447 = vsyncpa [#allocation4], 1

</llo_original>
